<compile_context>
chip_gen: v7x
topology: tpu7x:2x2x1
jax: 0.10.0
libtpu: 0.0.40
codegen_flags: <defaults>
</compile_context>

<pallas_src>
import jax
import jax.numpy as jnp
from jax.experimental import pallas as pl
from jax.experimental.pallas import tpu as pltpu

LANE = 128  # TPU lane width; time tiles are multiples of this (or the full T).


def _round_up(x, m):
    return ((x + m - 1) // m) * m


def temporal_attention_kernel(x_ref, w_ref, b_ref, o_ref):
    # x_ref: (bB, C, tT) io dtype   w_ref: (1, C, 1) f32   b_ref: (1,) f32 SMEM
    x = x_ref[...]                                   # (bB, C, tT)
    w = w_ref[...]                                   # (1, C, 1) f32
    b = b_ref[0]                                     # scalar from SMEM

    # 1x1 conv over channels == weighted channel reduction; f32 accumulate.
    logits = jnp.sum(x.astype(jnp.float32) * w, axis=1, keepdims=True) + b
    attn = jax.nn.sigmoid(logits)                    # (bB, 1, tT) f32

    # Gate multiply in the I/O dtype: halves the biggest full-tile temp and the
    # dominant VALU op for bf16 inputs (v6e/v7x bf16 VALUs); identical for f32.
    o_ref[...] = (x * attn.astype(x.dtype)).astype(o_ref.dtype)


def temporal_attention(x, weight, bias, *, t_tile=1024, target_step_bytes=2 << 20):
    """x: (B, C, T), weight: (C,), bias: scalar. Returns (B, C, T) in x.dtype."""
    B, C, T = x.shape
    out_dtype = x.dtype
    itemsize = jnp.dtype(out_dtype).itemsize

    # Sublane-padded channel extents as they land in VMEM tiles.
    sub_io = max(8, 32 // itemsize)                  # 8 (f32) / 16 (bf16) / 32 (i8)
    C_io = _round_up(C, sub_io)
    C_f32 = _round_up(C, 8)

    # --- time tile: lane-aligned; partial tail block is masked by Pallas -----
    if T <= LANE:
        tT = T                                       # full-extent block (exempt)
    else:
        tT = min(_round_up(t_tile, LANE), _round_up(T, LANE))

    # Per-step VMEM footprint: 2 double-buffered input + 2 output io-dtype tiles,
    # ~1 io-dtype temp (gated product) and ~3 full-tile f32 temps (upcast,
    # channel product, attn broadcast), all sublane-padded.  Conservative.
    def footprint(bB_, tT_):
        return bB_ * tT_ * (5 * C_io * itemsize + 3 * C_f32 * 4)

    # --- batch tile: make each step move ~target_step_bytes of x -------------
    bB = max(1, min(B, target_step_bytes // max(1, C_io * tT * itemsize)))

    budget = 16 << 20                                # safe everywhere incl. v5e
    while bB > 1 and footprint(bB, tT) > budget:
        bB = max(1, bB // 2)
    while T > LANE and tT > LANE and footprint(bB, tT) > budget:
        tT = max(LANE, (tT // 2) // LANE * LANE)

    # --- keep >= 2 grid steps: feeds both v7x TCs and lets DMA overlap -------
    if pl.cdiv(B, bB) * pl.cdiv(T, tT) < 2:
        if B >= 2:
            bB = (B + 1) // 2
        elif T >= 2 * LANE:
            tT = _round_up(pl.cdiv(T, 2), LANE)

    grid = (pl.cdiv(B, bB), pl.cdiv(T, tT))
    vmem_limit = int(min(32 << 20, max(16 << 20, footprint(bB, tT) + (4 << 20))))

    # Broadcast-ready f32 weight; scalar bias in SMEM.
    w3d = weight.reshape(1, C, 1).astype(jnp.float32)
    b1d = jnp.reshape(bias, (1,)).astype(jnp.float32)

    # TODO(synk): v5e-specific chunked (per-8-sublane) channel reduction not
    # applied; the io-dtype gate multiply already removes the largest f32 temp.
    return pl.pallas_call(
        temporal_attention_kernel,
        out_shape=jax.ShapeDtypeStruct((B, C, T), out_dtype),
        grid=grid,
        in_specs=[
            pl.BlockSpec((bB, C, tT), lambda b, t: (b, 0, t)),      # x tile
            pl.BlockSpec((1, C, 1), lambda b, t: (0, 0, 0)),        # conv weight
            pl.BlockSpec(memory_space=pltpu.MemorySpace.SMEM),      # conv bias
        ],
        out_specs=pl.BlockSpec((bB, C, tT), lambda b, t: (b, 0, t)),
        compiler_params=pltpu.CompilerParams(
            dimension_semantics=("parallel", "parallel"),
            vmem_limit_bytes=vmem_limit,
        ),
    )(x, w3d, b1d)


def temporal_attention_ref(x, weight, bias):
    x32 = x.astype(jnp.float32)
    logits = jnp.einsum("bct,c->bt", x32, weight.astype(jnp.float32)) + bias
    attn = jax.nn.sigmoid(logits)[:, None, :]        # (B, 1, T)
    return (x32 * attn).astype(x.dtype)


if __name__ == "__main__":
    B, C, T = 2, 4, 16

    key = jax.random.PRNGKey(0)
    kx, kw, kb = jax.random.split(key, 3)

    # Deterministic synthetic Conv1d(C, 1, kernel_size=1) params.
    weight = jax.random.normal(kw, (C,), dtype=jnp.float32) * 0.1
    bias = jax.random.normal(kb, (), dtype=jnp.float32) * 0.1

    # Small shape implied by the module's forward.
    x = jax.random.normal(kx, (B, C, T), dtype=jnp.float32)
    out = jax.block_until_ready(temporal_attention(x, weight, bias))
    ref = temporal_attention_ref(x, weight, bias)
    assert out.shape == (B, C, T)
    assert jnp.allclose(out, ref, atol=1e-5, rtol=1e-5)

    # Unaligned T (exercises the masked partial tail block, no pad/slice).
    T2 = 677
    x2 = jax.random.normal(kx, (B, C, T2), dtype=jnp.float32)
    out2 = jax.block_until_ready(temporal_attention(x2, weight, bias))
    ref2 = temporal_attention_ref(x2, weight, bias)
    assert out2.shape == (B, C, T2)
    assert jnp.allclose(out2, ref2, atol=1e-5, rtol=1e-5)

    # bf16 inputs (gate multiply done in bf16; ~1 bf16-ulp vs f32-then-cast).
    x3 = x2.astype(jnp.bfloat16)
    out3 = jax.block_until_ready(temporal_attention(x3, weight, bias))
    ref3 = temporal_attention_ref(x3, weight, bias)
    assert out3.dtype == jnp.bfloat16
    assert jnp.allclose(out3.astype(jnp.float32), ref3.astype(jnp.float32),
                        atol=5e-2, rtol=5e-2)

    print("KERNEL_OK")
</pallas_src>

<mosaic_0001>
module attributes {stable_mosaic.version = 11 : i64} {
  func.func @temporal_attention_kernel(%arg0: i32, %arg1: i32, %arg2: memref<1x4x16xf32, #tpu.memory_space<vmem>>, %arg3: memref<1x4x1xf32, #tpu.memory_space<vmem>>, %arg4: memref<1xf32, #tpu.memory_space<smem>>, %arg5: memref<1x4x16xf32, #tpu.memory_space<vmem>>) attributes {dimension_semantics = [#tpu.dimension_semantics<parallel>, #tpu.dimension_semantics<parallel>], iteration_bounds = array<i64: 2, 1>, scalar_prefetch = 0 : i64, scratch_operands = 0 : i64, tpu.core_type = #tpu.core_type<tc>, window_params = [{transform_indices = @transform_0, window_bounds = array<i64: 1, 4, 16>}, {pipeline_mode = #tpu.pipeline_mode<synchronous>, transform_indices = @transform_1, window_bounds = array<i64: 1, 4, 1>}, {transform_indices = @transform_2, window_bounds = array<i64: 1>}, {transform_indices = @transform_3, window_bounds = array<i64: 1, 4, 16>}]} {
    %c0 = arith.constant 0 : index
    %c0_0 = arith.constant 0 : index
    %c0_1 = arith.constant 0 : index
    %0 = vector.load %arg2[%c0, %c0_0, %c0_1] : memref<1x4x16xf32, #tpu.memory_space<vmem>>, vector<1x4x16xf32>
    %c0_2 = arith.constant 0 : index
    %c0_3 = arith.constant 0 : index
    %c0_4 = arith.constant 0 : index
    %1 = vector.load %arg3[%c0_2, %c0_3, %c0_4] : memref<1x4x1xf32, #tpu.memory_space<vmem>>, vector<1x4x1xf32>
    %c0_5 = arith.constant 0 : index
    %2 = memref.load %arg4[%c0_5] : memref<1xf32, #tpu.memory_space<smem>>
    %3 = vector.broadcast %1 : vector<1x4x1xf32> to vector<1x4x16xf32>
    %4 = arith.mulf %0, %3 : vector<1x4x16xf32>
    %cst = arith.constant dense<0.000000e+00> : vector<1x16xf32>
    %5 = vector.multi_reduction <add>, %4, %cst [1] : vector<1x4x16xf32> to vector<1x16xf32>
    %6 = vector.shape_cast %5 : vector<1x16xf32> to vector<1x1x16xf32>
    %7 = vector.broadcast %2 : f32 to vector<1x1x16xf32>
    %8 = arith.addf %6, %7 : vector<1x1x16xf32>
    %9 = arith.negf %8 : vector<1x1x16xf32>
    %10 = math.exp %9 : vector<1x1x16xf32>
    %cst_6 = arith.constant 1.000000e+00 : f32
    %11 = vector.broadcast %cst_6 : f32 to vector<1x1x16xf32>
    %12 = arith.addf %11, %10 : vector<1x1x16xf32>
    %13 = arith.divf %11, %12 : vector<1x1x16xf32>
    %14 = vector.broadcast %13 : vector<1x1x16xf32> to vector<1x4x16xf32>
    %15 = arith.mulf %0, %14 : vector<1x4x16xf32>
    %c0_7 = arith.constant 0 : index
    %c0_8 = arith.constant 0 : index
    %c0_9 = arith.constant 0 : index
    %16 = vector.load %arg5[%c0_7, %c0_8, %c0_9] : memref<1x4x16xf32, #tpu.memory_space<vmem>>, vector<1x4x16xf32>
    tpu.vector_store %arg5[%c0_7, %c0_8, %c0_9], %15 {strides = array<i32>} : memref<1x4x16xf32, #tpu.memory_space<vmem>>, vector<1x4x16xf32>,
    return
  }
  func.func @transform_0(%arg0: i32, %arg1: i32) -> (i32, i32, i32) {
    %c0_i32 = arith.constant 0 : i32
    %c0_i32_0 = arith.constant 0 : i32
    return %arg0, %c0_i32, %arg1 : i32, i32, i32
  }
  func.func @transform_1(%arg0: i32, %arg1: i32) -> (i32, i32, i32) {
    %c0_i32 = arith.constant 0 : i32
    %c0_i32_0 = arith.constant 0 : i32
    %c0_i32_1 = arith.constant 0 : i32
    %c0_i32_2 = arith.constant 0 : i32
    return %c0_i32, %c0_i32_0, %c0_i32_1 : i32, i32, i32
  }
  func.func @transform_2(%arg0: i32, %arg1: i32) -> i32 {
    %c0_i32 = arith.constant 0 : i32
    %c0_i32_0 = arith.constant 0 : i32
    return %c0_i32 : i32
  }
  func.func @transform_3(%arg0: i32, %arg1: i32) -> (i32, i32, i32) {
    %c0_i32 = arith.constant 0 : i32
    %c0_i32_0 = arith.constant 0 : i32
    return %arg0, %c0_i32, %arg1 : i32, i32, i32
  }
}

</mosaic_0001>

<llo_original>
// kernel: tpu_custom_call.1
$region0: #{tpu_custom_call.1}
  #allocation0 [shape = 'u32[]', space=smem, size = 0x4, offset = 0x4, fixed_abs, tag = 'smem constant byte address 0x4 - core index']
  #allocation1 [shape = 'u32[144,128]{1,0:T(1,128)}', space=vmem, size = 0x12000, scoped, tag = 'internal scratch']
  #allocation2 [shape = 'f32[1]{0:T(128)S(6)}', space=smem, size = 0x200, scoped, tag = 'scoped memory for tpu_custom_call.1']
  %s0 = inlined_call_operand.vmem [shape: f32[2,4,16], index: 0, kind: input, shape index: {}]
  %s1 = inlined_call_operand.vmem [shape: f32[1,4,1], index: 1, kind: input, shape index: {}]
  %s2 = inlined_call_operand.<no memory space> [shape: f32[1], index: 2, kind: input, shape index: {}]
  %s3 = inlined_call_operand.hbm [shape: f32[2,4,16], index: 3, kind: output, shape index: {}]
  %s4 = sld [smem:[#allocation0]]
  $region45: #{tpu_custom_call.1} parent=0
    _
  %s6 = ssub.s32 1, %s4
  %s7 = scalar_select 0, %s6, %s4
  %8 = sst [smem:[#allocation2]] %s2
  $region1: #{tpu_custom_call.1} parent=0
    #allocation3 [shape = 'u8[4096]{0}', space=vmem, size = 0x1000, scoped, tag = 'output window, operand 0']
    #allocation4 [shape = 's32[2]{0}', space=sflag, size = 0x8, scoped, tag = 'scoped memory for tpu_custom_call.1']
    %9 = vsyncpa [#allocation4], 0
    %s10 = scalar_lea.sflag [#allocation4], 1
    %11 = vsyncpa %s10, 0
    loop: start=0, step=1, limit=4
    $region2: #{tpu_custom_call.1} parent=1 // loop_pre_header
      _
    $region3: #{tpu_custom_call.1} parent=1 // loop_header
      %s13 = sphi 0, %s17
      %p14 = scmp.ge.s32.totalorder %s13, 4
      %s20 = sphi 0, %s32
      %s21 = sphi 0, %s28
      %s22 = sphi 0, %s20
      %s23 = sphi 0, %s21
      %s24 = sphi 0, %s22
      %s25 = sphi 0, %s23
      %s37 = sphi 0, %s39
      %s40 = sphi 0, %s37
      %s41 = sphi 0, %s40
      %s57 = sphi 0, %s41
      %s61 = sphi 0, %s61
      %s63 = sphi 0, %s61
      %s64 = sphi 0, %s63
      %s78 = sphi 0, %s64
      %s82 = sphi 0, %s82
      %s84 = sphi 0, %s82
      %s85 = sphi 0, %s84
      %s99 = sphi 0, %s85
      %s107 = sphi 0, %s109
      %s110 = sphi 0, %s107
      %s111 = sphi 0, %s110
      %s127 = sphi 0, %s111
    $region4: #{tpu_custom_call.1} parent=1 // loop_header_branch
      %16 = sbr.rel (%p14) target = $region8
    $region5: #{tpu_custom_call.1} parent=1 // loop_body
      %s18 = ssub.s32 %s13, 1
      %s19 = ssub.s32 %s13, 2
      %s26 = sadd.s32 1, %s21
      %p27 = scmp.ge.s32.totalorder %s26, 1
      %s28 = scalar_select %p27, 0, %s26
      %s29 = sadd.s32 1, %s20
      %s30 = scalar_select %p27, %s29, %s20
      %p31 = scmp.ge.s32.totalorder %s30, 2
      %s32 = scalar_select %p31, 0, %s30
      %s33 = ssub.s32 %s20, %s32
      %s34 = ssub.s32 %s21, %s28
      %s35 = sor.u32 %s33, %s34
      %p36 = scmp.eq.s32.totalorder %s35, 0
      %s38 = sadd.s32 %s37, 1
      %s39 = scalar_select %p36, %s37, %s38
      %p42 = pneg %p36
      %p43 = scmp.eq.s32.totalorder %s13, 1
      %p44 = por %p42, %p43
      %p45 = scmp.ne.s32.totalorder %s37, %s40
      %p46 = scmp.eq.s32.totalorder %s13, 0
      %p47 = por %p45, %p46
      %p48 = scmp.ne.s32.totalorder %s37, %s40
      %p49 = scmp.eq.s32.totalorder %s18, 1
      %p50 = por %p48, %p49
      %p51 = scmp.ne.s32.totalorder %s40, %s41
      %p52 = scmp.eq.s32.totalorder %s18, 0
      %p53 = por %p51, %p52
      %p54 = scmp.ne.s32.totalorder %s40, %s41
      %p55 = scmp.eq.s32.totalorder %s19, 1
      %p56 = por %p54, %p55
      %p58 = scmp.ne.s32.totalorder %s41, %s57
      %p59 = scmp.eq.s32.totalorder %s19, 0
      %p60 = por %p58, %p59
      %s62 = sadd.s32 %s61, 1
      %p65 = scmp.eq.s32.totalorder %s13, 1
      %p66 = scmp.ne.s32.totalorder %s61, %s63
      %p67 = scmp.eq.s32.totalorder %s13, 0
      %p68 = por %p66, %p67
      %p69 = scmp.ne.s32.totalorder %s61, %s63
      %p70 = scmp.eq.s32.totalorder %s18, 1
      %p71 = por %p69, %p70
      %p72 = scmp.ne.s32.totalorder %s63, %s64
      %p73 = scmp.eq.s32.totalorder %s18, 0
      %p74 = por %p72, %p73
      %p75 = scmp.ne.s32.totalorder %s63, %s64
      %p76 = scmp.eq.s32.totalorder %s19, 1
      %p77 = por %p75, %p76
      %p79 = scmp.ne.s32.totalorder %s64, %s78
      %p80 = scmp.eq.s32.totalorder %s19, 0
      %p81 = por %p79, %p80
      %s83 = sadd.s32 %s82, 1
      %p86 = scmp.eq.s32.totalorder %s13, 1
      %p87 = scmp.ne.s32.totalorder %s82, %s84
      %p88 = scmp.eq.s32.totalorder %s13, 0
      %p89 = por %p87, %p88
      %p90 = scmp.ne.s32.totalorder %s82, %s84
      %p91 = scmp.eq.s32.totalorder %s18, 1
      %p92 = por %p90, %p91
      %p93 = scmp.ne.s32.totalorder %s84, %s85
      %p94 = scmp.eq.s32.totalorder %s18, 0
      %p95 = por %p93, %p94
      %p96 = scmp.ne.s32.totalorder %s84, %s85
      %p97 = scmp.eq.s32.totalorder %s19, 1
      %p98 = por %p96, %p97
      %p100 = scmp.ne.s32.totalorder %s85, %s99
      %p101 = scmp.eq.s32.totalorder %s19, 0
      %p102 = por %p100, %p101
      %s103 = ssub.s32 %s20, %s32
      %s104 = ssub.s32 %s21, %s28
      %s105 = sor.u32 %s103, %s104
      %p106 = scmp.eq.s32.totalorder %s105, 0
      %s108 = sadd.s32 %s107, 1
      %s109 = scalar_select %p106, %s107, %s108
      %p112 = pneg %p106
      %p113 = scmp.eq.s32.totalorder %s13, 1
      %p114 = por %p112, %p113
      %p115 = scmp.ne.s32.totalorder %s107, %s110
      %p116 = scmp.eq.s32.totalorder %s13, 0
      %p117 = por %p115, %p116
      %p118 = scmp.ne.s32.totalorder %s107, %s110
      %p119 = scmp.eq.s32.totalorder %s18, 1
      %p120 = por %p118, %p119
      %p121 = scmp.ne.s32.totalorder %s110, %s111
      %p122 = scmp.eq.s32.totalorder %s18, 0
      %p123 = por %p121, %p122
      %p124 = scmp.ne.s32.totalorder %s110, %s111
      %p125 = scmp.eq.s32.totalorder %s19, 1
      %p126 = por %p124, %p125
      %p128 = scmp.ne.s32.totalorder %s111, %s127
      %p129 = scmp.eq.s32.totalorder %s19, 0
      %p130 = por %p128, %p129
      %p131 = scmp.le.s32.totalorder 1, %s13
      %p132 = scmp.lt.s32.totalorder %s13, 3
      %p133 = pnand %p131, %p132
      %p134 = pneg %p133
      // Predicated region
      $region9: #{tpu_custom_call.1} parent=5 // pred_check
        _
      $region10: #{tpu_custom_call.1} parent=5 // pred_check_branch
        %136 = sbr.rel (%p133) target = $region12
      $region11: #{tpu_custom_call.1} parent=5 // pred_region
        %s137 = ssub.s32 %s13, 1
        // Predicated region
        $region13: #{tpu_custom_call.1} parent=11 // pred_check
          %p138 = pneg %p74
        $region14: #{tpu_custom_call.1} parent=11 // pred_check_branch
          %140 = sbr.rel (%p138) target = $region16
        $region15: #{tpu_custom_call.1} parent=11 // pred_region
          _
        $region16: #{tpu_custom_call.1} parent=11 // pred_fallthru
          _
        // Predicated region
        $region17: #{tpu_custom_call.1} parent=11 // pred_check
          %p141 = pneg %p95
        $region18: #{tpu_custom_call.1} parent=11 // pred_check_branch
          %143 = sbr.rel (%p141) target = $region20
        $region19: #{tpu_custom_call.1} parent=11 // pred_region
          _
        $region20: #{tpu_custom_call.1} parent=11 // pred_fallthru
          _
      $region12: #{tpu_custom_call.1} parent=5 // pred_fallthru
        _
      %p144 = scmp.lt.s32.totalorder %s13, 2
      // Predicated region
      $region21: #{tpu_custom_call.1} parent=5 // pred_check
        %p145 = pneg %p144
      $region22: #{tpu_custom_call.1} parent=5 // pred_check_branch
        %147 = sbr.rel (%p145) target = $region24
      $region23: #{tpu_custom_call.1} parent=5 // pred_region
        // Predicated region
        $region25: #{tpu_custom_call.1} parent=23 // pred_check
          %p148 = pneg %p47
        $region26: #{tpu_custom_call.1} parent=23 // pred_check_branch
          %150 = sbr.rel (%p148) target = $region28
        $region27: #{tpu_custom_call.1} parent=23 // pred_region
          %p151 = scmp.lt.s32.totalorder %s20, 1
          %s152 = scalar_select %p151, %s20, 1
          %p153 = scmp.lt.s32.totalorder %s21, 0
          %s154 = scalar_select %p153, %s21, 0
          %s155 = sadd.s32 %s154, %s152
          %s156 = smul.addr %s155, 4
          %s157 = scalar_lea.vmem %s0, %s156
        $region28: #{tpu_custom_call.1} parent=23 // pred_fallthru
          _
      $region24: #{tpu_custom_call.1} parent=5 // pred_fallthru
        _
      %p158 = scmp.le.s32.totalorder 1, %s13
      %p159 = scmp.lt.s32.totalorder %s13, 3
      %p160 = pnand %p158, %p159
      %p161 = pneg %p160
      // Predicated region
      $region29: #{tpu_custom_call.1} parent=5 // pred_check
        _
      $region30: #{tpu_custom_call.1} parent=5 // pred_check_branch
        %163 = sbr.rel (%p160) target = $region32
      $region31: #{tpu_custom_call.1} parent=5 // pred_region
        %s164 = ssub.s32 %s13, 1
        %p165 = scmp.lt.s32.totalorder %s22, 1
        %s166 = scalar_select %p165, %s22, 1
        %p167 = scmp.lt.s32.totalorder %s23, 0
        %s168 = scalar_select %p167, %s23, 0
        %s169 = sadd.s32 %s168, %s166
        %s170 = smul.addr %s169, 4
        %s171 = scalar_lea.vmem %s0, %s170
        %p172 = pneg %p53
        %p173 = pneg %p50
        %p174 = pneg %p74
        %p175 = pneg %p71
        %p176 = pneg %p95
        %p177 = pneg %p92
        %p178 = pneg %p123
        %p179 = pneg %p120
        %s180 = sand.u32 %s110, 1
        %s181 = scalar_lea.sflag [#allocation4], %s180
        %s182 = sand.u32 %s110, 1
        %s183 = smul.addr %s182, 4
        %s184 = scalar_lea.vmem [#allocation3], %s183
        %p185 = scmp.lt.s32.totalorder %s22, 1
        %s186 = scalar_select %p185, %s22, 1
        %p187 = scmp.lt.s32.totalorder %s23, 0
        %s188 = scalar_select %p187, %s23, 0
        %s189 = sadd.s32 %s188, %s186
        %s190 = smul.addr %s189, 4
        %s191 = scalar_lea.vmem %s0, %s190
        %v192 = vld [vmem:[%s191] sm:$0xf]
        %v193 = vld [vmem:[%s1] sm:$0xf]
        %s194 = sld [smem:[#allocation2]]
        %196 = vset.pattern.permute.xlu0 0
        %197 = vperm.xlu0 %196, %v193
        %v198 = vpop.permute.xlu0 %197
        %v200 = vmul.f32 %v192, %v198
        %vm201 = vcmask 125952
        %v202 = vsel %vm201, %v200, 0.0
        %v203 = vrot.slane %v202, 4
        %v204 = vadd.f32 %v202, %v203
        %v205 = vrot.slane %v204, 2
        %v206 = vadd.f32 %v204, %v205
        %v207 = vrot.slane %v206, 1
        %v208 = vadd.f32 %v206, %v207
        %v209 = vstv %s194
        %v210 = vadd.f32 %v208, %v209
        %v211 = vxor.u32 %v210, 2147483648
        %v212 = vmul.f32 %v211, 1.442695
        %v213 = vpow.pop %v212
        %v214 = vadd.f32 %v213, 1.0
        %v215 = vrcp.pop %v214
        %v216 = vmul.f32 1.0, %v215
        %v217 = vmul.f32 %v192, %v216
        %218 = vst.msk [vmem:[%s184] sm:$0xf] %vm201, %v217
        %s219 = sand.u32 %s110, 1
        %s220 = scalar_lea.sflag [#allocation4], %s219
        %s221 = sand.u32 %s110, 1
        %s222 = smul.addr %s221, 4
        %s223 = scalar_lea.vmem [#allocation3], %s222
        // Predicated region
        $region33: #{tpu_custom_call.1} parent=31 // pred_check
          %p224 = pneg %p120
        $region34: #{tpu_custom_call.1} parent=31 // pred_check_branch
          %226 = sbr.rel (%p224) target = $region36
        $region35: #{tpu_custom_call.1} parent=31 // pred_region
          %s228 = ssub.s32 64, 64
          %229 = vsyncadd %s220, %s228
          %s230 = sadd.s32 %s23, %s22
          %s231 = smul.addr %s230, 64
          %s232 = scalar_lea.hbm %s3, %s231
          %s234 = sshll.u32 %s223, 4
          %s235 = int_to_ptr.vmem [resolvable:$true] %s234
          %237 = dma.vmem_to_hbm [thread:$0]  %s235, 64, %s232, %s220
        $region36: #{tpu_custom_call.1} parent=31 // pred_fallthru
          _
      $region32: #{tpu_custom_call.1} parent=5 // pred_fallthru
        _
      %p238 = scmp.le.s32.totalorder 2, %s13
      // Predicated region
      $region37: #{tpu_custom_call.1} parent=5 // pred_check
        %p239 = pneg %p238
      $region38: #{tpu_custom_call.1} parent=5 // pred_check_branch
        %241 = sbr.rel (%p239) target = $region40
      $region39: #{tpu_custom_call.1} parent=5 // pred_region
        %s242 = ssub.s32 %s13, 2
        // Predicated region
        $region41: #{tpu_custom_call.1} parent=39 // pred_check
          %p243 = pneg %p126
        $region42: #{tpu_custom_call.1} parent=39 // pred_check_branch
          %245 = sbr.rel (%p243) target = $region44
        $region43: #{tpu_custom_call.1} parent=39 // pred_region
          %s246 = sand.u32 %s111, 1
          %s247 = scalar_lea.sflag [#allocation4], %s246
          %s248 = sand.u32 %s111, 1
          %s249 = smul.addr %s248, 4
          %s250 = scalar_lea.vmem [#allocation3], %s249
          %251 = dma.done %s247, 64
        $region44: #{tpu_custom_call.1} parent=39 // pred_fallthru
          _
      $region40: #{tpu_custom_call.1} parent=5 // pred_fallthru
        _
    $region6: #{tpu_custom_call.1} parent=1 // loop_footer
      %s17 = sadd.s32 1, %s13
    $region7: #{tpu_custom_call.1} parent=1 // loop_footer_branch
      %12 = sbr.rel target = $region3
    $region8: #{tpu_custom_call.1} parent=1 // loop_exit
      _
    %252 = vsyncpa [#allocation4], 1
    %s253 = scalar_lea.sflag [#allocation4], 1
    %254 = vsyncpa %s253, 1

</llo_original>
